<compile_context>
chip_gen: v7x
topology: tpu7x:2x2x1
jax: 0.10.0
libtpu: 0.0.40
codegen_flags: <defaults>
</compile_context>

<pallas_src>
import jax
import jax.numpy as jnp
from jax.experimental import pallas as pl
from jax.experimental.pallas import tpu as pltpu


def _make_kernel(H, W, HW, Nb, layout):
    """Fused residual-block kernel over a (C, Nb*HW) lane-dense activation slab."""
    L = Nb * HW

    def kernel(x_ref, z_ref, slab_ref, out_ref):
        def take(name):
            off, (r, c) = layout[name]
            return slab_ref[off:off + r, 0:c]        # static, 8-aligned ref view

        x = x_ref[...]                               # (C, L) f32
        C = x.shape[0]

        # Per-lane (h, w) coordinate masks over the flattened (sample, pixel)
        # lane axis.  Built once, shared by both convs.
        lane = jax.lax.broadcasted_iota(jnp.int32, (C, L), 1)
        col = lane % W
        pix = lane % HW
        w_lo = col == 0
        w_hi = col == W - 1
        h_lo = pix < W
        h_hi = pix >= (H - 1) * W

        def shifted(flat, s):
            # y[:, i] = flat[:, (i + s) mod L].  Block-edge / sample-boundary
            # wrap is repaired by the reflect masks below (every final value is
            # drawn from an in-sample, in-range source).
            if s % L == 0:
                return flat
            return pltpu.roll(flat, (-s) % L, axis=1)   # pltpu.roll == jnp.roll

        def conv3x3_instnorm(flat, wc):
            # flat: (Cin, L); wc: (Cout, 9*Cin), (ky,kx)-major / Cin-minor.
            # Roll-based im2col: 8 XLU lane rotations + masked reflect fix-ups.
            r = {(dy, dx): shifted(flat, dy * W + dx)
                 for dy in (-1, 0, 1) for dx in (-1, 0, 1)}
            cfix = {}
            for dy in (-1, 0, 1):
                cfix[(dy, -1)] = jnp.where(w_lo, r[(dy, 1)], r[(dy, -1)])
                cfix[(dy, 0)] = r[(dy, 0)]
                cfix[(dy, 1)] = jnp.where(w_hi, r[(dy, -1)], r[(dy, 1)])
            taps = []
            for dy in (-1, 0, 1):
                for dx in (-1, 0, 1):
                    if dy == -1:
                        taps.append(jnp.where(h_lo, cfix[(1, dx)], cfix[(-1, dx)]))
                    elif dy == 1:
                        taps.append(jnp.where(h_hi, cfix[(-1, dx)], cfix[(1, dx)]))
                    else:
                        taps.append(cfix[(0, dx)])
            pat = jnp.concatenate(taps, axis=0)                       # (9*Cin, L)
            acc = jnp.dot(wc, pat, preferred_element_type=jnp.float32)
            # Conv bias omitted: it cancels in InstanceNorm(affine=False).
            # Per-sample InstanceNorm, single-pass stats, lane-aligned slices.
            inv_hw = 1.0 / HW
            outs = []
            for n in range(Nb):
                a = acc[:, n * HW:(n + 1) * HW]
                mean = jnp.sum(a, axis=1, keepdims=True) * inv_hw
                ex2 = jnp.sum(a * a, axis=1, keepdims=True) * inv_hw
                var = ex2 - mean * mean
                outs.append((a - mean) * jax.lax.rsqrt(var + 1e-5))
            return outs[0] if Nb == 1 else jnp.concatenate(outs, axis=1)

        def z_bias(w1z, b1):
            # cat([o, z_expand]) @ W1: the z columns reduce to a per-sample
            # (Cmid, 1) vector folded into the bias (lane broadcast).
            cols = []
            for n in range(Nb):
                zrow = z_ref[n]                                        # (1, E)
                zc = jnp.sum(w1z * zrow, axis=1, keepdims=True) + b1   # (Cmid, 1)
                cols.append(zc if Nb == 1
                            else jnp.broadcast_to(zc, (zc.shape[0], HW)))
            return cols[0] if Nb == 1 else jnp.concatenate(cols, axis=1)

        def blk1x1(o, zb, w1o, w2, b2):
            h1 = jnp.dot(w1o, o, preferred_element_type=jnp.float32) + zb
            h1 = jnp.maximum(h1, 0.0)
            y = jnp.dot(w2, h1, preferred_element_type=jnp.float32) + b2
            return jnp.maximum(y, 0.0)

        o1 = conv3x3_instnorm(x, take("wc1"))
        o2 = blk1x1(o1, z_bias(take("w1z1"), take("b11")),
                    take("w1o1"), take("w21"), take("b21"))
        o3 = conv3x3_instnorm(o2, take("wc2"))
        y = blk1x1(o3, z_bias(take("w1z2"), take("b12")),
                   take("w1o2"), take("w22"), take("b22"))
        out_ref[...] = y + x                                           # residual

    return kernel


def _pack_params(pieces):
    """Row-pack all weight/bias arrays into one slab (8-aligned row offsets)."""
    width = max(int(a.shape[1]) for a in pieces.values())
    layout, rows, padded = {}, 0, []
    for name, a in pieces.items():
        r, c = int(a.shape[0]), int(a.shape[1])
        layout[name] = (rows, (r, c))
        r8 = -(-r // 8) * 8
        padded.append(jnp.pad(a, ((0, r8 - r), (0, width - c))))
        rows += r8
    return jnp.concatenate(padded, axis=0), layout


def mis_ins_resblock_forward(x_nchw, z, params, *, samples_per_block=None):
    """x_nchw: (N, dim, H, W); z: (N, dim_extra); params in PyTorch layouts."""
    N, C, H, W = x_nchw.shape
    E = z.shape[1]
    Cmid = C + E
    HW = H * W
    f32 = jnp.float32

    # Samples per grid step: batch to amortize per-step overhead / grow DMAs,
    # but keep >=2 grid blocks when possible so v7x's two TensorCores both work.
    def _ok(nb):
        return N % nb == 0 and ((nb * HW) % 128 == 0 or nb == N)

    if samples_per_block is not None:
        Nb = samples_per_block
        assert _ok(Nb), (N, HW, Nb)
    else:
        cap = min(8, max(1, N // 2))
        Nb = next((c for c in range(cap, 0, -1) if _ok(c)), N)
    L = Nb * HW

    # Lane-dense activation layout: channels on sublanes, (sample, pixel) on
    # lanes.  The transpose happens once in HBM via XLA, never inside the kernel.
    xf = (x_nchw.astype(f32).reshape(N, C, HW)
          .transpose(1, 0, 2).reshape(C, N * HW))
    z3 = z.astype(f32).reshape(N, 1, E)

    def conv_w(w):   # (Cout, Cin, 3, 3) -> (Cout, 9*Cin), tap-major / Cin-minor
        co, ci = w.shape[0], w.shape[1]
        return jnp.transpose(w.astype(f32), (0, 2, 3, 1)).reshape(co, 9 * ci)

    w1a = params["blk1_w1"].astype(f32)
    w1b = params["blk2_w1"].astype(f32)
    # conv1_b / conv2_b are intentionally NOT passed: a per-channel bias added
    # before InstanceNorm2d(affine=False) cancels exactly.
    pieces = {
        "wc1": conv_w(params["conv1_w"]),
        "w1o1": w1a[:, :C], "w1z1": w1a[:, C:],
        "b11": params["blk1_b1"].astype(f32).reshape(Cmid, 1),
        "w21": params["blk1_w2"].astype(f32),
        "b21": params["blk1_b2"].astype(f32).reshape(C, 1),
        "wc2": conv_w(params["conv2_w"]),
        "w1o2": w1b[:, :C], "w1z2": w1b[:, C:],
        "b12": params["blk2_b1"].astype(f32).reshape(Cmid, 1),
        "w22": params["blk2_w2"].astype(f32),
        "b22": params["blk2_b2"].astype(f32).reshape(C, 1),
    }
    slab, layout = _pack_params(pieces)   # one resident weight DMA instead of ~15

    kernel = _make_kernel(H, W, HW, Nb, layout)

    conv_flops = 2 * C * 9 * C * HW
    blk_flops = 2 * Cmid * C * HW + 2 * C * Cmid * HW + 2 * Cmid * E
    cost = pl.CostEstimate(
        flops=N * 2 * (conv_flops + blk_flops),
        transcendentals=N * 2 * C,
        bytes_accessed=2 * N * C * HW * 4 + N * E * 4 + int(slab.size) * 4,
    )

    out_flat = pl.pallas_call(
        kernel,
        out_shape=jax.ShapeDtypeStruct((C, N * HW), f32),
        grid=(N // Nb,),
        in_specs=[
            pl.BlockSpec((C, L), lambda n: (0, n)),          # x (also residual)
            pl.BlockSpec((Nb, 1, E), lambda n: (n, 0, 0)),   # z
            pl.BlockSpec(slab.shape, lambda n: (0, 0)),      # packed weights (resident)
        ],
        out_specs=pl.BlockSpec((C, L), lambda n: (0, n)),
        compiler_params=pltpu.CompilerParams(dimension_semantics=("parallel",)),
        cost_estimate=cost,
    )(xf, z3, slab)

    # TODO(synk): for large H*W (e.g. 256x256) add a spatial-tile grid axis with
    # halo handling and set vmem_limit_bytes explicitly; needed sooner on v7x's
    # 64 MiB VMEM than on v5e/v6e's 128 MiB.  bf16 activations (v6e/v7x) would
    # halve DMA bytes but loosen the f32 tolerance check, so f32 is kept here.
    return out_flat.reshape(C, N, HW).transpose(1, 0, 2).reshape(N, C, H, W)


# ----------------------------------------------------------------------------
# Pure-JAX (XLA) reference for correctness checking, NCHW like PyTorch.
# ----------------------------------------------------------------------------
def ref_forward(x, z, p):
    def conv3_in(xx, w, b):
        xp = jnp.pad(xx, ((0, 0), (0, 0), (1, 1), (1, 1)), mode="reflect")
        y = jax.lax.conv_general_dilated(
            xp, w.astype(jnp.float32), (1, 1), "VALID",
            dimension_numbers=("NCHW", "OIHW", "NCHW"))
        y = y + b.reshape(1, -1, 1, 1)
        mean = jnp.mean(y, axis=(2, 3), keepdims=True)
        var = jnp.mean((y - mean) ** 2, axis=(2, 3), keepdims=True)
        return (y - mean) * jax.lax.rsqrt(var + 1e-5)

    def blk_ref(o, zz, w1, b1, w2, b2):
        n, c, h, w = o.shape
        ze = jnp.broadcast_to(zz[:, :, None, None], (n, zz.shape[1], h, w))
        cat = jnp.concatenate([o, ze], axis=1)
        hh = jnp.maximum(
            jnp.einsum("nchw,dc->ndhw", cat, w1) + b1.reshape(1, -1, 1, 1), 0.0)
        return jnp.maximum(
            jnp.einsum("nchw,dc->ndhw", hh, w2) + b2.reshape(1, -1, 1, 1), 0.0)

    o1 = conv3_in(x, p["conv1_w"], p["conv1_b"])
    o2 = blk_ref(o1, z, p["blk1_w1"], p["blk1_b1"], p["blk1_w2"], p["blk1_b2"])
    o3 = conv3_in(o2, p["conv2_w"], p["conv2_b"])
    o4 = blk_ref(o3, z, p["blk2_w1"], p["blk2_b1"], p["blk2_w2"], p["blk2_b2"])
    return o4 + x


if __name__ == "__main__":
    N, dim, dim_extra, H, W = 2, 4, 8, 16, 16
    Cmid = dim + dim_extra
    key = jax.random.PRNGKey(0)
    ks = jax.random.split(key, 16)

    x = jax.random.normal(ks[0], (N, dim, H, W), jnp.float32)   # NCHW like PyTorch
    z = jax.random.normal(ks[1], (N, dim_extra), jnp.float32)

    # PyTorch-layout parameters, conv weights ~ N(0, 0.02) (gaussian_weights_init).
    params = {
        "conv1_w": 0.02 * jax.random.normal(ks[2], (dim, dim, 3, 3), jnp.float32),
        "conv1_b": 0.02 * jax.random.normal(ks[3], (dim,), jnp.float32),
        "conv2_w": 0.02 * jax.random.normal(ks[4], (dim, dim, 3, 3), jnp.float32),
        "conv2_b": 0.02 * jax.random.normal(ks[5], (dim,), jnp.float32),
        "blk1_w1": 0.02 * jax.random.normal(ks[6], (Cmid, Cmid), jnp.float32),
        "blk1_b1": 0.02 * jax.random.normal(ks[7], (Cmid,), jnp.float32),
        "blk1_w2": 0.02 * jax.random.normal(ks[8], (dim, Cmid), jnp.float32),
        "blk1_b2": 0.02 * jax.random.normal(ks[9], (dim,), jnp.float32),
        "blk2_w1": 0.02 * jax.random.normal(ks[10], (Cmid, Cmid), jnp.float32),
        "blk2_b1": 0.02 * jax.random.normal(ks[11], (Cmid,), jnp.float32),
        "blk2_w2": 0.02 * jax.random.normal(ks[12], (dim, Cmid), jnp.float32),
        "blk2_b2": 0.02 * jax.random.normal(ks[13], (dim,), jnp.float32),
    }

    out = jax.block_until_ready(mis_ins_resblock_forward(x, z, params))

    ref = ref_forward(x, z, params)
    assert out.shape == (N, dim, H, W), out.shape
    err = float(jnp.max(jnp.abs(out - ref)))
    assert jnp.allclose(out, ref, atol=1e-4, rtol=1e-4), err

    print("KERNEL_OK")
</pallas_src>

<mosaic_0001>
module attributes {stable_mosaic.version = 11 : i64} {
  func.func @kernel(%arg0: i32, %arg1: memref<4x256xf32, #tpu.memory_space<vmem>>, %arg2: memref<1x1x8xf32, #tpu.memory_space<vmem>>, %arg3: memref<144x36xf32, #tpu.memory_space<vmem>>, %arg4: memref<4x256xf32, #tpu.memory_space<vmem>>) attributes {dimension_semantics = [#tpu.dimension_semantics<parallel>], iteration_bounds = array<i64: 2>, scalar_prefetch = 0 : i64, scratch_operands = 0 : i64, tpu.core_type = #tpu.core_type<tc>, window_params = [{transform_indices = @transform_0, window_bounds = array<i64: 4, 256>}, {transform_indices = @transform_1, window_bounds = array<i64: 1, 1, 8>}, {pipeline_mode = #tpu.pipeline_mode<synchronous>, transform_indices = @transform_2, window_bounds = array<i64: 144, 36>}, {transform_indices = @transform_3, window_bounds = array<i64: 4, 256>}]} {
    %c0 = arith.constant 0 : index
    %c0_0 = arith.constant 0 : index
    %0 = vector.load %arg1[%c0, %c0_0] : memref<4x256xf32, #tpu.memory_space<vmem>>, vector<4x256xf32>
    %1 = tpu.iota {dimensions = array<i32: 1>} : vector<4x256xi32>
    %c16_i32 = arith.constant 16 : i32
    %c0_i32 = arith.constant 0 : i32
    %2 = arith.cmpi eq, %c16_i32, %c0_i32 : i32
    %c1_i32 = arith.constant 1 : i32
    %3 = arith.select %2, %c1_i32, %c16_i32 : i32
    %4 = vector.broadcast %3 : i32 to vector<4x256xi32>
    %5 = arith.remsi %1, %4 : vector<4x256xi32>
    %c0_i32_1 = arith.constant 0 : i32
    %6 = vector.broadcast %c0_i32_1 : i32 to vector<4x256xi32>
    %7 = arith.cmpi ne, %5, %6 : vector<4x256xi32>
    %c0_i32_2 = arith.constant 0 : i32
    %8 = vector.broadcast %c0_i32_2 : i32 to vector<4x256xi32>
    %9 = arith.cmpi slt, %5, %8 : vector<4x256xi32>
    %c0_i32_3 = arith.constant 0 : i32
    %10 = arith.cmpi slt, %3, %c0_i32_3 : i32
    %11 = vector.broadcast %10 : i1 to vector<4x256xi1>
    %12 = vector.broadcast %11 : vector<4x256xi1> to vector<4x256xi1>
    %13 = arith.xori %9, %12 : vector<4x256xi1>
    %14 = arith.andi %13, %7 : vector<4x256xi1>
    %15 = vector.broadcast %3 : i32 to vector<4x256xi32>
    %16 = arith.addi %5, %15 : vector<4x256xi32>
    %17 = arith.select %14, %16, %5 : vector<4x256xi1>, vector<4x256xi32>
    %c256_i32 = arith.constant 256 : i32
    %c0_i32_4 = arith.constant 0 : i32
    %18 = arith.cmpi eq, %c256_i32, %c0_i32_4 : i32
    %c1_i32_5 = arith.constant 1 : i32
    %19 = arith.select %18, %c1_i32_5, %c256_i32 : i32
    %20 = vector.broadcast %19 : i32 to vector<4x256xi32>
    %21 = arith.remsi %1, %20 : vector<4x256xi32>
    %c0_i32_6 = arith.constant 0 : i32
    %22 = vector.broadcast %c0_i32_6 : i32 to vector<4x256xi32>
    %23 = arith.cmpi ne, %21, %22 : vector<4x256xi32>
    %c0_i32_7 = arith.constant 0 : i32
    %24 = vector.broadcast %c0_i32_7 : i32 to vector<4x256xi32>
    %25 = arith.cmpi slt, %21, %24 : vector<4x256xi32>
    %c0_i32_8 = arith.constant 0 : i32
    %26 = arith.cmpi slt, %19, %c0_i32_8 : i32
    %27 = vector.broadcast %26 : i1 to vector<4x256xi1>
    %28 = vector.broadcast %27 : vector<4x256xi1> to vector<4x256xi1>
    %29 = arith.xori %25, %28 : vector<4x256xi1>
    %30 = arith.andi %29, %23 : vector<4x256xi1>
    %31 = vector.broadcast %19 : i32 to vector<4x256xi32>
    %32 = arith.addi %21, %31 : vector<4x256xi32>
    %33 = arith.select %30, %32, %21 : vector<4x256xi1>, vector<4x256xi32>
    %c0_i32_9 = arith.constant 0 : i32
    %34 = vector.broadcast %c0_i32_9 : i32 to vector<4x256xi32>
    %35 = arith.cmpi eq, %17, %34 : vector<4x256xi32>
    %c15_i32 = arith.constant 15 : i32
    %36 = vector.broadcast %c15_i32 : i32 to vector<4x256xi32>
    %37 = arith.cmpi eq, %17, %36 : vector<4x256xi32>
    %c16_i32_10 = arith.constant 16 : i32
    %38 = vector.broadcast %c16_i32_10 : i32 to vector<4x256xi32>
    %39 = arith.cmpi slt, %33, %38 : vector<4x256xi32>
    %c240_i32 = arith.constant 240 : i32
    %40 = vector.broadcast %c240_i32 : i32 to vector<4x256xi32>
    %41 = arith.cmpi sge, %33, %40 : vector<4x256xi32>
    %c0_11 = arith.constant 0 : index
    %c0_12 = arith.constant 0 : index
    %42 = vector.load %arg3[%c0_11, %c0_12] : memref<144x36xf32, #tpu.memory_space<vmem>>, vector<4x36xf32>
    %c17_i32 = arith.constant 17 : i32
    %43 = tpu.dynamic_rotate %0 by %c17_i32 dim 1 : vector<4x256xf32>, i32 -> vector<4x256xf32>
    %c16_i32_13 = arith.constant 16 : i32
    %44 = tpu.dynamic_rotate %0 by %c16_i32_13 dim 1 : vector<4x256xf32>, i32 -> vector<4x256xf32>
    %c15_i32_14 = arith.constant 15 : i32
    %45 = tpu.dynamic_rotate %0 by %c15_i32_14 dim 1 : vector<4x256xf32>, i32 -> vector<4x256xf32>
    %c1_i32_15 = arith.constant 1 : i32
    %46 = tpu.dynamic_rotate %0 by %c1_i32_15 dim 1 : vector<4x256xf32>, i32 -> vector<4x256xf32>
    %c255_i32 = arith.constant 255 : i32
    %47 = tpu.dynamic_rotate %0 by %c255_i32 dim 1 : vector<4x256xf32>, i32 -> vector<4x256xf32>
    %c241_i32 = arith.constant 241 : i32
    %48 = tpu.dynamic_rotate %0 by %c241_i32 dim 1 : vector<4x256xf32>, i32 -> vector<4x256xf32>
    %c240_i32_16 = arith.constant 240 : i32
    %49 = tpu.dynamic_rotate %0 by %c240_i32_16 dim 1 : vector<4x256xf32>, i32 -> vector<4x256xf32>
    %c239_i32 = arith.constant 239 : i32
    %50 = tpu.dynamic_rotate %0 by %c239_i32 dim 1 : vector<4x256xf32>, i32 -> vector<4x256xf32>
    %51 = arith.select %35, %45, %43 : vector<4x256xi1>, vector<4x256xf32>
    %52 = arith.select %37, %43, %45 : vector<4x256xi1>, vector<4x256xf32>
    %53 = arith.select %35, %47, %46 : vector<4x256xi1>, vector<4x256xf32>
    %54 = arith.select %37, %46, %47 : vector<4x256xi1>, vector<4x256xf32>
    %55 = arith.select %35, %50, %48 : vector<4x256xi1>, vector<4x256xf32>
    %56 = arith.select %37, %48, %50 : vector<4x256xi1>, vector<4x256xf32>
    %57 = arith.select %39, %55, %51 : vector<4x256xi1>, vector<4x256xf32>
    %58 = arith.select %39, %49, %44 : vector<4x256xi1>, vector<4x256xf32>
    %59 = arith.select %39, %56, %52 : vector<4x256xi1>, vector<4x256xf32>
    %60 = arith.select %41, %51, %55 : vector<4x256xi1>, vector<4x256xf32>
    %61 = arith.select %41, %44, %49 : vector<4x256xi1>, vector<4x256xf32>
    %62 = arith.select %41, %52, %56 : vector<4x256xi1>, vector<4x256xf32>
    %63 = tpu.concatenate %57, %58, %59, %53, %0, %54, %60, %61, %62 in 0 : vector<4x256xf32>, vector<4x256xf32>, vector<4x256xf32>, vector<4x256xf32>, vector<4x256xf32>, vector<4x256xf32>, vector<4x256xf32>, vector<4x256xf32>, vector<4x256xf32> -> vector<36x256xf32>
    %cst = arith.constant dense<0.000000e+00> : vector<4x256xf32>
    %64 = tpu.matmul %42, %63, %cst {dimension_numbers = #tpu.dot_dimension_numbers<[1], [0], [0], [1], [0, 0, 1, 1], [], []>} : vector<4x36xf32>, vector<36x256xf32>, vector<4x256xf32> -> vector<4x256xf32>
    %cst_17 = arith.constant dense<0.000000e+00> : vector<4xf32>
    %65 = vector.multi_reduction <add>, %64, %cst_17 [1] : vector<4x256xf32> to vector<4xf32>
    %66 = vector.shape_cast %65 : vector<4xf32> to vector<4x1xf32>
    %cst_18 = arith.constant 3.906250e-03 : f32
    %67 = vector.broadcast %cst_18 : f32 to vector<4x1xf32>
    %68 = arith.mulf %66, %67 : vector<4x1xf32>
    %69 = arith.mulf %64, %64 : vector<4x256xf32>
    %cst_19 = arith.constant dense<0.000000e+00> : vector<4xf32>
    %70 = vector.multi_reduction <add>, %69, %cst_19 [1] : vector<4x256xf32> to vector<4xf32>
    %71 = vector.shape_cast %70 : vector<4xf32> to vector<4x1xf32>
    %cst_20 = arith.constant 3.906250e-03 : f32
    %72 = vector.broadcast %cst_20 : f32 to vector<4x1xf32>
    %73 = arith.mulf %71, %72 : vector<4x1xf32>
    %74 = arith.mulf %68, %68 : vector<4x1xf32>
    %75 = arith.subf %73, %74 : vector<4x1xf32>
    %76 = vector.broadcast %68 : vector<4x1xf32> to vector<4x256xf32>
    %77 = arith.subf %64, %76 : vector<4x256xf32>
    %cst_21 = arith.constant 9.99999974E-6 : f32
    %78 = vector.broadcast %cst_21 : f32 to vector<4x1xf32>
    %79 = arith.addf %75, %78 : vector<4x1xf32>
    %80 = math.rsqrt %79 : vector<4x1xf32>
    %81 = vector.broadcast %80 : vector<4x1xf32> to vector<4x256xf32>
    %82 = arith.mulf %77, %81 : vector<4x256xf32>
    %c24 = arith.constant 24 : index
    %c0_22 = arith.constant 0 : index
    %83 = vector.load %arg3[%c24, %c0_22] : memref<144x36xf32, #tpu.memory_space<vmem>>, vector<12x8xf32>
    %c40 = arith.constant 40 : index
    %c0_23 = arith.constant 0 : index
    %84 = vector.load %arg3[%c40, %c0_23] : memref<144x36xf32, #tpu.memory_space<vmem>>, vector<12x1xf32>
    %c0_24 = arith.constant 0 : index
    %c0_25 = arith.constant 0 : index
    %c0_26 = arith.constant 0 : index
    %85 = vector.load %arg2[%c0_24, %c0_25, %c0_26] : memref<1x1x8xf32, #tpu.memory_space<vmem>>, vector<1x1x8xf32>
    %86 = vector.shape_cast %85 : vector<1x1x8xf32> to vector<1x8xf32>
    %87 = vector.broadcast %86 : vector<1x8xf32> to vector<12x8xf32>
    %88 = arith.mulf %83, %87 : vector<12x8xf32>
    %cst_27 = arith.constant dense<0.000000e+00> : vector<12xf32>
    %89 = vector.multi_reduction <add>, %88, %cst_27 [1] : vector<12x8xf32> to vector<12xf32>
    %90 = vector.shape_cast %89 : vector<12xf32> to vector<12x1xf32>
    %91 = arith.addf %90, %84 : vector<12x1xf32>
    %c8 = arith.constant 8 : index
    %c0_28 = arith.constant 0 : index
    %92 = vector.load %arg3[%c8, %c0_28] : memref<144x36xf32, #tpu.memory_space<vmem>>, vector<12x4xf32>
    %c56 = arith.constant 56 : index
    %c0_29 = arith.constant 0 : index
    %93 = vector.load %arg3[%c56, %c0_29] : memref<144x36xf32, #tpu.memory_space<vmem>>, vector<4x12xf32>
    %c64 = arith.constant 64 : index
    %c0_30 = arith.constant 0 : index
    %94 = vector.load %arg3[%c64, %c0_30] : memref<144x36xf32, #tpu.memory_space<vmem>>, vector<4x1xf32>
    %cst_31 = arith.constant dense<0.000000e+00> : vector<12x256xf32>
    %95 = tpu.matmul %92, %82, %cst_31 {dimension_numbers = #tpu.dot_dimension_numbers<[1], [0], [0], [1], [0, 0, 1, 1], [], []>} : vector<12x4xf32>, vector<4x256xf32>, vector<12x256xf32> -> vector<12x256xf32>
    %96 = vector.broadcast %91 : vector<12x1xf32> to vector<12x256xf32>
    %97 = arith.addf %95, %96 : vector<12x256xf32>
    %cst_32 = arith.constant 0.000000e+00 : f32
    %98 = vector.broadcast %cst_32 : f32 to vector<12x256xf32>
    %99 = arith.maximumf %97, %98 : vector<12x256xf32>
    %cst_33 = arith.constant dense<0.000000e+00> : vector<4x256xf32>
    %100 = tpu.matmul %93, %99, %cst_33 {dimension_numbers = #tpu.dot_dimension_numbers<[1], [0], [0], [1], [0, 0, 1, 1], [], []>} : vector<4x12xf32>, vector<12x256xf32>, vector<4x256xf32> -> vector<4x256xf32>
    %101 = vector.broadcast %94 : vector<4x1xf32> to vector<4x256xf32>
    %102 = arith.addf %100, %101 : vector<4x256xf32>
    %cst_34 = arith.constant 0.000000e+00 : f32
    %103 = vector.broadcast %cst_34 : f32 to vector<4x256xf32>
    %104 = arith.maximumf %102, %103 : vector<4x256xf32>
    %c72 = arith.constant 72 : index
    %c0_35 = arith.constant 0 : index
    %105 = vector.load %arg3[%c72, %c0_35] : memref<144x36xf32, #tpu.memory_space<vmem>>, vector<4x36xf32>
    %c17_i32_36 = arith.constant 17 : i32
    %106 = tpu.dynamic_rotate %104 by %c17_i32_36 dim 1 : vector<4x256xf32>, i32 -> vector<4x256xf32>
    %c16_i32_37 = arith.constant 16 : i32
    %107 = tpu.dynamic_rotate %104 by %c16_i32_37 dim 1 : vector<4x256xf32>, i32 -> vector<4x256xf32>
    %c15_i32_38 = arith.constant 15 : i32
    %108 = tpu.dynamic_rotate %104 by %c15_i32_38 dim 1 : vector<4x256xf32>, i32 -> vector<4x256xf32>
    %c1_i32_39 = arith.constant 1 : i32
    %109 = tpu.dynamic_rotate %104 by %c1_i32_39 dim 1 : vector<4x256xf32>, i32 -> vector<4x256xf32>
    %c255_i32_40 = arith.constant 255 : i32
    %110 = tpu.dynamic_rotate %104 by %c255_i32_40 dim 1 : vector<4x256xf32>, i32 -> vector<4x256xf32>
    %c241_i32_41 = arith.constant 241 : i32
    %111 = tpu.dynamic_rotate %104 by %c241_i32_41 dim 1 : vector<4x256xf32>, i32 -> vector<4x256xf32>
    %c240_i32_42 = arith.constant 240 : i32
    %112 = tpu.dynamic_rotate %104 by %c240_i32_42 dim 1 : vector<4x256xf32>, i32 -> vector<4x256xf32>
    %c239_i32_43 = arith.constant 239 : i32
    %113 = tpu.dynamic_rotate %104 by %c239_i32_43 dim 1 : vector<4x256xf32>, i32 -> vector<4x256xf32>
    %114 = arith.select %35, %108, %106 : vector<4x256xi1>, vector<4x256xf32>
    %115 = arith.select %37, %106, %108 : vector<4x256xi1>, vector<4x256xf32>
    %116 = arith.select %35, %110, %109 : vector<4x256xi1>, vector<4x256xf32>
    %117 = arith.select %37, %109, %110 : vector<4x256xi1>, vector<4x256xf32>
    %118 = arith.select %35, %113, %111 : vector<4x256xi1>, vector<4x256xf32>
    %119 = arith.select %37, %111, %113 : vector<4x256xi1>, vector<4x256xf32>
    %120 = arith.select %39, %118, %114 : vector<4x256xi1>, vector<4x256xf32>
    %121 = arith.select %39, %112, %107 : vector<4x256xi1>, vector<4x256xf32>
    %122 = arith.select %39, %119, %115 : vector<4x256xi1>, vector<4x256xf32>
    %123 = arith.select %41, %114, %118 : vector<4x256xi1>, vector<4x256xf32>
    %124 = arith.select %41, %107, %112 : vector<4x256xi1>, vector<4x256xf32>
    %125 = arith.select %41, %115, %119 : vector<4x256xi1>, vector<4x256xf32>
    %126 = tpu.concatenate %120, %121, %122, %116, %104, %117, %123, %124, %125 in 0 : vector<4x256xf32>, vector<4x256xf32>, vector<4x256xf32>, vector<4x256xf32>, vector<4x256xf32>, vector<4x256xf32>, vector<4x256xf32>, vector<4x256xf32>, vector<4x256xf32> -> vector<36x256xf32>
    %cst_44 = arith.constant dense<0.000000e+00> : vector<4x256xf32>
    %127 = tpu.matmul %105, %126, %cst_44 {dimension_numbers = #tpu.dot_dimension_numbers<[1], [0], [0], [1], [0, 0, 1, 1], [], []>} : vector<4x36xf32>, vector<36x256xf32>, vector<4x256xf32> -> vector<4x256xf32>
    %cst_45 = arith.constant dense<0.000000e+00> : vector<4xf32>
    %128 = vector.multi_reduction <add>, %127, %cst_45 [1] : vector<4x256xf32> to vector<4xf32>
    %129 = vector.shape_cast %128 : vector<4xf32> to vector<4x1xf32>
    %cst_46 = arith.constant 3.906250e-03 : f32
    %130 = vector.broadcast %cst_46 : f32 to vector<4x1xf32>
    %131 = arith.mulf %129, %130 : vector<4x1xf32>
    %132 = arith.mulf %127, %127 : vector<4x256xf32>
    %cst_47 = arith.constant dense<0.000000e+00> : vector<4xf32>
    %133 = vector.multi_reduction <add>, %132, %cst_47 [1] : vector<4x256xf32> to vector<4xf32>
    %134 = vector.shape_cast %133 : vector<4xf32> to vector<4x1xf32>
    %cst_48 = arith.constant 3.906250e-03 : f32
    %135 = vector.broadcast %cst_48 : f32 to vector<4x1xf32>
    %136 = arith.mulf %134, %135 : vector<4x1xf32>
    %137 = arith.mulf %131, %131 : vector<4x1xf32>
    %138 = arith.subf %136, %137 : vector<4x1xf32>
    %139 = vector.broadcast %131 : vector<4x1xf32> to vector<4x256xf32>
    %140 = arith.subf %127, %139 : vector<4x256xf32>
    %cst_49 = arith.constant 9.99999974E-6 : f32
    %141 = vector.broadcast %cst_49 : f32 to vector<4x1xf32>
    %142 = arith.addf %138, %141 : vector<4x1xf32>
    %143 = math.rsqrt %142 : vector<4x1xf32>
    %144 = vector.broadcast %143 : vector<4x1xf32> to vector<4x256xf32>
    %145 = arith.mulf %140, %144 : vector<4x256xf32>
    %c96 = arith.constant 96 : index
    %c0_50 = arith.constant 0 : index
    %146 = vector.load %arg3[%c96, %c0_50] : memref<144x36xf32, #tpu.memory_space<vmem>>, vector<12x8xf32>
    %c112 = arith.constant 112 : index
    %c0_51 = arith.constant 0 : index
    %147 = vector.load %arg3[%c112, %c0_51] : memref<144x36xf32, #tpu.memory_space<vmem>>, vector<12x1xf32>
    %c0_52 = arith.constant 0 : index
    %c0_53 = arith.constant 0 : index
    %c0_54 = arith.constant 0 : index
    %148 = vector.load %arg2[%c0_52, %c0_53, %c0_54] : memref<1x1x8xf32, #tpu.memory_space<vmem>>, vector<1x1x8xf32>
    %149 = vector.shape_cast %148 : vector<1x1x8xf32> to vector<1x8xf32>
    %150 = vector.broadcast %149 : vector<1x8xf32> to vector<12x8xf32>
    %151 = arith.mulf %146, %150 : vector<12x8xf32>
    %cst_55 = arith.constant dense<0.000000e+00> : vector<12xf32>
    %152 = vector.multi_reduction <add>, %151, %cst_55 [1] : vector<12x8xf32> to vector<12xf32>
    %153 = vector.shape_cast %152 : vector<12xf32> to vector<12x1xf32>
    %154 = arith.addf %153, %147 : vector<12x1xf32>
    %c80 = arith.constant 80 : index
    %c0_56 = arith.constant 0 : index
    %155 = vector.load %arg3[%c80, %c0_56] : memref<144x36xf32, #tpu.memory_space<vmem>>, vector<12x4xf32>
    %c128 = arith.constant 128 : index
    %c0_57 = arith.constant 0 : index
    %156 = vector.load %arg3[%c128, %c0_57] : memref<144x36xf32, #tpu.memory_space<vmem>>, vector<4x12xf32>
    %c136 = arith.constant 136 : index
    %c0_58 = arith.constant 0 : index
    %157 = vector.load %arg3[%c136, %c0_58] : memref<144x36xf32, #tpu.memory_space<vmem>>, vector<4x1xf32>
    %cst_59 = arith.constant dense<0.000000e+00> : vector<12x256xf32>
    %158 = tpu.matmul %155, %145, %cst_59 {dimension_numbers = #tpu.dot_dimension_numbers<[1], [0], [0], [1], [0, 0, 1, 1], [], []>} : vector<12x4xf32>, vector<4x256xf32>, vector<12x256xf32> -> vector<12x256xf32>
    %159 = vector.broadcast %154 : vector<12x1xf32> to vector<12x256xf32>
    %160 = arith.addf %158, %159 : vector<12x256xf32>
    %cst_60 = arith.constant 0.000000e+00 : f32
    %161 = vector.broadcast %cst_60 : f32 to vector<12x256xf32>
    %162 = arith.maximumf %160, %161 : vector<12x256xf32>
    %cst_61 = arith.constant dense<0.000000e+00> : vector<4x256xf32>
    %163 = tpu.matmul %156, %162, %cst_61 {dimension_numbers = #tpu.dot_dimension_numbers<[1], [0], [0], [1], [0, 0, 1, 1], [], []>} : vector<4x12xf32>, vector<12x256xf32>, vector<4x256xf32> -> vector<4x256xf32>
    %164 = vector.broadcast %157 : vector<4x1xf32> to vector<4x256xf32>
    %165 = arith.addf %163, %164 : vector<4x256xf32>
    %cst_62 = arith.constant 0.000000e+00 : f32
    %166 = vector.broadcast %cst_62 : f32 to vector<4x256xf32>
    %167 = arith.maximumf %165, %166 : vector<4x256xf32>
    %168 = arith.addf %167, %0 : vector<4x256xf32>
    %c0_63 = arith.constant 0 : index
    %c0_64 = arith.constant 0 : index
    %169 = vector.load %arg4[%c0_63, %c0_64] : memref<4x256xf32, #tpu.memory_space<vmem>>, vector<4x256xf32>
    tpu.vector_store %arg4[%c0_63, %c0_64], %168 {strides = array<i32>} : memref<4x256xf32, #tpu.memory_space<vmem>>, vector<4x256xf32>,
    return
  }
  func.func @transform_0(%arg0: i32) -> (i32, i32) {
    %c0_i32 = arith.constant 0 : i32
    %c0_i32_0 = arith.constant 0 : i32
    return %c0_i32, %arg0 : i32, i32
  }
  func.func @transform_1(%arg0: i32) -> (i32, i32, i32) {
    %c0_i32 = arith.constant 0 : i32
    %c0_i32_0 = arith.constant 0 : i32
    %c0_i32_1 = arith.constant 0 : i32
    return %arg0, %c0_i32, %c0_i32_0 : i32, i32, i32
  }
  func.func @transform_2(%arg0: i32) -> (i32, i32) {
    %c0_i32 = arith.constant 0 : i32
    %c0_i32_0 = arith.constant 0 : i32
    %c0_i32_1 = arith.constant 0 : i32
    return %c0_i32, %c0_i32_0 : i32, i32
  }
  func.func @transform_3(%arg0: i32) -> (i32, i32) {
    %c0_i32 = arith.constant 0 : i32
    %c0_i32_0 = arith.constant 0 : i32
    return %c0_i32, %arg0 : i32, i32
  }
}

</mosaic_0001>

<llo_original>
// kernel: tpu_custom_call.1
$region0: #{tpu_custom_call.1}
  #allocation0 [shape = 'u32[]', space=smem, size = 0x4, offset = 0x4, fixed_abs, tag = 'smem constant byte address 0x4 - core index']
  #allocation1 [shape = 'u32[144,128]{1,0:T(1,128)}', space=vmem, size = 0x12000, scoped, tag = 'internal scratch']
  %s0 = inlined_call_operand.vmem [shape: f32[4,512], index: 0, kind: input, shape index: {}]
  %s1 = inlined_call_operand.vmem [shape: f32[2,1,8], index: 1, kind: input, shape index: {}]
  %s2 = inlined_call_operand.vmem [shape: f32[144,36], index: 2, kind: input, shape index: {}]
  %s3 = inlined_call_operand.hbm [shape: f32[4,512], index: 3, kind: output, shape index: {}]
  %s4 = sld [smem:[#allocation0]]
  $region45: #{tpu_custom_call.1} parent=0
    _
  %s6 = ssub.s32 1, %s4
  %s7 = scalar_select 0, %s6, %s4
  $region1: #{tpu_custom_call.1} parent=0
    #allocation2 [shape = 'u8[8192]{0}', space=vmem, size = 0x2000, scoped, tag = 'output window, operand 0']
    #allocation3 [shape = 's32[2]{0}', space=sflag, size = 0x8, scoped, tag = 'scoped memory for tpu_custom_call.1']
    %8 = vsyncpa [#allocation3], 0
    %s9 = scalar_lea.sflag [#allocation3], 1
    %10 = vsyncpa %s9, 0
    loop: start=0, step=1, limit=4
    $region2: #{tpu_custom_call.1} parent=1 // loop_pre_header
      _
    $region3: #{tpu_custom_call.1} parent=1 // loop_header
      %s12 = sphi 0, %s16
      %p13 = scmp.ge.s32.totalorder %s12, 4
      %s22 = sphi 0, %s24
      %s25 = sphi 0, %s22
      %s26 = sphi 0, %s25
      %s42 = sphi 0, %s26
      %s48 = sphi 0, %s50
      %s51 = sphi 0, %s48
      %s52 = sphi 0, %s51
      %s68 = sphi 0, %s52
      %s72 = sphi 0, %s72
      %s74 = sphi 0, %s72
      %s75 = sphi 0, %s74
      %s89 = sphi 0, %s75
      %s95 = sphi 0, %s97
      %s98 = sphi 0, %s95
      %s99 = sphi 0, %s98
      %s115 = sphi 0, %s99
    $region4: #{tpu_custom_call.1} parent=1 // loop_header_branch
      %15 = sbr.rel (%p13) target = $region8
    $region5: #{tpu_custom_call.1} parent=1 // loop_body
      %s17 = ssub.s32 %s12, 1
      %s18 = ssub.s32 %s12, 2
      %s19 = sadd.s32 %s12, 1
      %s20 = ssub.s32 %s12, %s19
      %p21 = scmp.eq.s32.totalorder %s20, 0
      %s23 = sadd.s32 %s22, 1
      %s24 = scalar_select %p21, %s22, %s23
      %p27 = pneg %p21
      %p28 = scmp.eq.s32.totalorder %s12, 1
      %p29 = por %p27, %p28
      %p30 = scmp.ne.s32.totalorder %s22, %s25
      %p31 = scmp.eq.s32.totalorder %s12, 0
      %p32 = por %p30, %p31
      %p33 = scmp.ne.s32.totalorder %s22, %s25
      %p34 = scmp.eq.s32.totalorder %s17, 1
      %p35 = por %p33, %p34
      %p36 = scmp.ne.s32.totalorder %s25, %s26
      %p37 = scmp.eq.s32.totalorder %s17, 0
      %p38 = por %p36, %p37
      %p39 = scmp.ne.s32.totalorder %s25, %s26
      %p40 = scmp.eq.s32.totalorder %s18, 1
      %p41 = por %p39, %p40
      %p43 = scmp.ne.s32.totalorder %s26, %s42
      %p44 = scmp.eq.s32.totalorder %s18, 0
      %p45 = por %p43, %p44
      %s46 = ssub.s32 %s12, %s19
      %p47 = scmp.eq.s32.totalorder %s46, 0
      %s49 = sadd.s32 %s48, 1
      %s50 = scalar_select %p47, %s48, %s49
      %p53 = pneg %p47
      %p54 = scmp.eq.s32.totalorder %s12, 1
      %p55 = por %p53, %p54
      %p56 = scmp.ne.s32.totalorder %s48, %s51
      %p57 = scmp.eq.s32.totalorder %s12, 0
      %p58 = por %p56, %p57
      %p59 = scmp.ne.s32.totalorder %s48, %s51
      %p60 = scmp.eq.s32.totalorder %s17, 1
      %p61 = por %p59, %p60
      %p62 = scmp.ne.s32.totalorder %s51, %s52
      %p63 = scmp.eq.s32.totalorder %s17, 0
      %p64 = por %p62, %p63
      %p65 = scmp.ne.s32.totalorder %s51, %s52
      %p66 = scmp.eq.s32.totalorder %s18, 1
      %p67 = por %p65, %p66
      %p69 = scmp.ne.s32.totalorder %s52, %s68
      %p70 = scmp.eq.s32.totalorder %s18, 0
      %p71 = por %p69, %p70
      %s73 = sadd.s32 %s72, 1
      %p76 = scmp.eq.s32.totalorder %s12, 1
      %p77 = scmp.ne.s32.totalorder %s72, %s74
      %p78 = scmp.eq.s32.totalorder %s12, 0
      %p79 = por %p77, %p78
      %p80 = scmp.ne.s32.totalorder %s72, %s74
      %p81 = scmp.eq.s32.totalorder %s17, 1
      %p82 = por %p80, %p81
      %p83 = scmp.ne.s32.totalorder %s74, %s75
      %p84 = scmp.eq.s32.totalorder %s17, 0
      %p85 = por %p83, %p84
      %p86 = scmp.ne.s32.totalorder %s74, %s75
      %p87 = scmp.eq.s32.totalorder %s18, 1
      %p88 = por %p86, %p87
      %p90 = scmp.ne.s32.totalorder %s75, %s89
      %p91 = scmp.eq.s32.totalorder %s18, 0
      %p92 = por %p90, %p91
      %s93 = ssub.s32 %s12, %s19
      %p94 = scmp.eq.s32.totalorder %s93, 0
      %s96 = sadd.s32 %s95, 1
      %s97 = scalar_select %p94, %s95, %s96
      %p100 = pneg %p94
      %p101 = scmp.eq.s32.totalorder %s12, 1
      %p102 = por %p100, %p101
      %p103 = scmp.ne.s32.totalorder %s95, %s98
      %p104 = scmp.eq.s32.totalorder %s12, 0
      %p105 = por %p103, %p104
      %p106 = scmp.ne.s32.totalorder %s95, %s98
      %p107 = scmp.eq.s32.totalorder %s17, 1
      %p108 = por %p106, %p107
      %p109 = scmp.ne.s32.totalorder %s98, %s99
      %p110 = scmp.eq.s32.totalorder %s17, 0
      %p111 = por %p109, %p110
      %p112 = scmp.ne.s32.totalorder %s98, %s99
      %p113 = scmp.eq.s32.totalorder %s18, 1
      %p114 = por %p112, %p113
      %p116 = scmp.ne.s32.totalorder %s99, %s115
      %p117 = scmp.eq.s32.totalorder %s18, 0
      %p118 = por %p116, %p117
      %p119 = scmp.le.s32.totalorder 1, %s12
      %p120 = scmp.lt.s32.totalorder %s12, 3
      %p121 = pnand %p119, %p120
      %p122 = pneg %p121
      // Predicated region
      $region9: #{tpu_custom_call.1} parent=5 // pred_check
        _
      $region10: #{tpu_custom_call.1} parent=5 // pred_check_branch
        %124 = sbr.rel (%p121) target = $region12
      $region11: #{tpu_custom_call.1} parent=5 // pred_region
        %s125 = ssub.s32 %s12, 1
        // Predicated region
        $region13: #{tpu_custom_call.1} parent=11 // pred_check
          %p126 = pneg %p85
        $region14: #{tpu_custom_call.1} parent=11 // pred_check_branch
          %128 = sbr.rel (%p126) target = $region16
        $region15: #{tpu_custom_call.1} parent=11 // pred_region
          _
        $region16: #{tpu_custom_call.1} parent=11 // pred_fallthru
          _
      $region12: #{tpu_custom_call.1} parent=5 // pred_fallthru
        _
      %p129 = scmp.lt.s32.totalorder %s12, 2
      // Predicated region
      $region17: #{tpu_custom_call.1} parent=5 // pred_check
        %p130 = pneg %p129
      $region18: #{tpu_custom_call.1} parent=5 // pred_check_branch
        %132 = sbr.rel (%p130) target = $region20
      $region19: #{tpu_custom_call.1} parent=5 // pred_region
        // Predicated region
        $region21: #{tpu_custom_call.1} parent=19 // pred_check
          %p133 = pneg %p32
        $region22: #{tpu_custom_call.1} parent=19 // pred_check_branch
          %135 = sbr.rel (%p133) target = $region24
        $region23: #{tpu_custom_call.1} parent=19 // pred_region
          %s136 = smul.u32 2, %s12
          %p137 = scmp.lt.s32.totalorder %s136, 3
          %s138 = scalar_select %p137, %s136, 3
          %s139 = smul.addr %s138, 4
          %s140 = scalar_lea.vmem %s0, %s139
          %s141 = smul.u32 2, %s12
        $region24: #{tpu_custom_call.1} parent=19 // pred_fallthru
          _
        // Predicated region
        $region25: #{tpu_custom_call.1} parent=19 // pred_check
          %p142 = pneg %p58
        $region26: #{tpu_custom_call.1} parent=19 // pred_check_branch
          %144 = sbr.rel (%p142) target = $region28
        $region27: #{tpu_custom_call.1} parent=19 // pred_region
          %p145 = scmp.lt.s32.totalorder %s12, 1
          %s146 = scalar_select %p145, %s12, 1
          %s147 = scalar_lea.vmem %s1, %s146
        $region28: #{tpu_custom_call.1} parent=19 // pred_fallthru
          _
      $region20: #{tpu_custom_call.1} parent=5 // pred_fallthru
        _
      %p148 = scmp.le.s32.totalorder 1, %s12
      %p149 = scmp.lt.s32.totalorder %s12, 3
      %p150 = pnand %p148, %p149
      %p151 = pneg %p150
      // Predicated region
      $region29: #{tpu_custom_call.1} parent=5 // pred_check
        _
      $region30: #{tpu_custom_call.1} parent=5 // pred_check_branch
        %153 = sbr.rel (%p150) target = $region32
      $region31: #{tpu_custom_call.1} parent=5 // pred_region
        %s154 = ssub.s32 %s12, 1
        %s155 = smul.u32 2, %s17
        %p156 = scmp.lt.s32.totalorder %s155, 3
        %s157 = scalar_select %p156, %s155, 3
        %s158 = smul.addr %s157, 4
        %s159 = scalar_lea.vmem %s0, %s158
        %p160 = pneg %p38
        %p161 = pneg %p35
        %p162 = scmp.lt.s32.totalorder %s17, 1
        %s163 = scalar_select %p162, %s17, 1
        %s164 = scalar_lea.vmem %s1, %s163
        %p165 = pneg %p64
        %p166 = pneg %p61
        %p167 = pneg %p85
        %p168 = pneg %p82
        %p169 = pneg %p111
        %p170 = pneg %p108
        %s171 = sand.u32 %s98, 1
        %s172 = scalar_lea.sflag [#allocation3], %s171
        %s173 = sand.u32 %s98, 1
        %s174 = smul.addr %s173, 8
        %s175 = scalar_lea.vmem [#allocation2], %s174
        %s176 = smul.u32 2, %s17
        %p177 = scmp.lt.s32.totalorder %s176, 3
        %s178 = scalar_select %p177, %s176, 3
        %s179 = smul.addr %s178, 4
        %s180 = scalar_lea.vmem %s0, %s179
        %s181 = smul.u32 2, %s17
        %p182 = scmp.lt.s32.totalorder %s17, 1
        %s183 = scalar_select %p182, %s17, 1
        %s184 = scalar_lea.vmem %s1, %s183
        %s185 = smul.u32 2, %s17
        %v186 = vld [vmem:[%s180] sm:$0xff]
        %v187 = vlaneseq
        %v188 = vand.u32 %v187, 127
        %v189 = vadd.s32 %v188, 128
        %vm190 = vcmp.lt.s32.totalorder %v188, 0
        %v191 = vsub.s32 0, %v188
        %v192 = vsel %vm190, %v191, %v188
        %v193 = vshrl.u32 %v192, 4
        %v194 = vand.u32 %v192, 15
        %v195 = vsub.s32 0, %v194
        %v196 = vsel %vm190, %v195, %v194
        %vm197 = vcmp.lt.s32.totalorder %v189, 0
        %v198 = vsub.s32 0, %v189
        %v199 = vsel %vm197, %v198, %v189
        %v200 = vshrl.u32 %v199, 4
        %v201 = vand.u32 %v199, 15
        %v202 = vsub.s32 0, %v201
        %v203 = vsel %vm197, %v202, %v201
        %vm204 = vcmp.ne.s32.totalorder %v196, 0
        %vm205 = vcmp.ne.s32.totalorder %v203, 0
        %vm206 = vcmp.lt.s32.totalorder %v196, 0
        %vm207 = vcmp.lt.s32.totalorder %v203, 0
        %vm208 = vmand %vm206, %vm204
        %vm209 = vmand %vm207, %vm205
        %v210 = vadd.s32 %v196, 16
        %v211 = vadd.s32 %v203, 16
        %v212 = vsel %vm208, %v210, %v196
        %v213 = vsel %vm209, %v211, %v203
        %vm214 = vcmp.lt.s32.totalorder %v188, 0
        %v215 = vsub.s32 0, %v188
        %v216 = vsel %vm214, %v215, %v188
        %v217 = vshrl.u32 %v216, 8
        %v218 = vand.u32 %v216, 255
        %v219 = vsub.s32 0, %v218
        %v220 = vsel %vm214, %v219, %v218
        %vm221 = vcmp.lt.s32.totalorder %v189, 0
        %v222 = vsub.s32 0, %v189
        %v223 = vsel %vm221, %v222, %v189
        %v224 = vshrl.u32 %v223, 8
        %v225 = vand.u32 %v223, 255
        %v226 = vsub.s32 0, %v225
        %v227 = vsel %vm221, %v226, %v225
        %vm228 = vcmp.ne.s32.totalorder %v220, 0
        %vm229 = vcmp.ne.s32.totalorder %v227, 0
        %vm230 = vcmp.lt.s32.totalorder %v220, 0
        %vm231 = vcmp.lt.s32.totalorder %v227, 0
        %vm232 = vmand %vm230, %vm228
        %vm233 = vmand %vm231, %vm229
        %v234 = vadd.s32 %v220, 256
        %v235 = vadd.s32 %v227, 256
        %v236 = vsel %vm232, %v234, %v220
        %v237 = vsel %vm233, %v235, %v227
        %vm238 = vcmp.eq.s32.totalorder %v212, 0
        %vm239 = vcmp.eq.s32.totalorder %v213, 0
        %vm240 = vcmp.eq.s32.totalorder %v212, 15
        %vm241 = vcmp.eq.s32.totalorder %v213, 15
        %vm242 = vcmp.lt.s32.totalorder %v236, 16
        %vm243 = vcmp.lt.s32.totalorder %v237, 16
        %vm244 = vcmp.ge.s32.totalorder %v236, 240
        %vm245 = vcmp.ge.s32.totalorder %v237, 240
        %v246 = vld [vmem:[%s2] sm:$0xf]
        %v248 = vcombine.high %v186, %v186
        %250 = vrot.lane.b32.xlu0 %v186, 17
        %v251 = vpop.permute.xlu0 %250
        %252 = vrot.lane.b32.xlu0 %v248, 17
        %v253 = vpop.permute.xlu0 %252
        %vm254 = vcmp.lt.s32.totalorder %v188, 17
        %v255 = vsel %vm254, %v251, %v253
        %v256 = vsel %vm254, %v253, %v251
        %257 = vrot.lane.b32.xlu0 %v186, 16
        %v258 = vpop.permute.xlu0 %257
        %259 = vrot.lane.b32.xlu0 %v248, 16
        %v260 = vpop.permute.xlu0 %259
        %vm261 = vcmp.lt.s32.totalorder %v188, 16
        %v262 = vsel %vm261, %v258, %v260
        %v263 = vsel %vm261, %v260, %v258
        %264 = vrot.lane.b32.xlu0 %v186, 15
        %v265 = vpop.permute.xlu0 %264
        %266 = vrot.lane.b32.xlu0 %v248, 15
        %v267 = vpop.permute.xlu0 %266
        %vm268 = vcmp.lt.s32.totalorder %v188, 15
        %v269 = vsel %vm268, %v265, %v267
        %v270 = vsel %vm268, %v267, %v265
        %271 = vrot.lane.b32.xlu0 %v186, 1
        %v272 = vpop.permute.xlu0 %271
        %273 = vrot.lane.b32.xlu0 %v248, 1
        %v274 = vpop.permute.xlu0 %273
        %vm275 = vcmp.lt.s32.totalorder %v188, 1
        %v276 = vsel %vm275, %v272, %v274
        %v277 = vsel %vm275, %v274, %v272
        %278 = vrot.lane.b32.xlu0 %v186, 127
        %v279 = vpop.permute.xlu0 %278
        %280 = vrot.lane.b32.xlu0 %v248, 127
        %v281 = vpop.permute.xlu0 %280
        %vm282 = vcmp.lt.s32.totalorder %v188, 127
        %v283 = vsel %vm282, %v279, %v281
        %v284 = vsel %vm282, %v281, %v279
        %285 = vrot.lane.b32.xlu0 %v186, 113
        %v286 = vpop.permute.xlu0 %285
        %287 = vrot.lane.b32.xlu0 %v248, 113
        %v288 = vpop.permute.xlu0 %287
        %vm289 = vcmp.lt.s32.totalorder %v188, 113
        %v290 = vsel %vm289, %v286, %v288
        %v291 = vsel %vm289, %v288, %v286
        %292 = vrot.lane.b32.xlu0 %v186, 112
        %v293 = vpop.permute.xlu0 %292
        %294 = vrot.lane.b32.xlu0 %v248, 112
        %v295 = vpop.permute.xlu0 %294
        %vm296 = vcmp.lt.s32.totalorder %v188, 112
        %v297 = vsel %vm296, %v293, %v295
        %v298 = vsel %vm296, %v295, %v293
        %299 = vrot.lane.b32.xlu0 %v186, 111
        %v300 = vpop.permute.xlu0 %299
        %301 = vrot.lane.b32.xlu0 %v248, 111
        %v302 = vpop.permute.xlu0 %301
        %vm303 = vcmp.lt.s32.totalorder %v188, 111
        %v304 = vsel %vm303, %v300, %v302
        %v305 = vsel %vm303, %v302, %v300
        %v306 = vsel %vm238, %v270, %v256
        %v307 = vsel %vm239, %v269, %v255
        %v308 = vsel %vm240, %v256, %v270
        %v309 = vsel %vm241, %v255, %v269
        %v310 = vsel %vm238, %v283, %v277
        %v311 = vsel %vm239, %v284, %v276
        %v312 = vsel %vm240, %v277, %v283
        %v313 = vsel %vm241, %v276, %v284
        %v314 = vsel %vm238, %v304, %v290
        %v315 = vsel %vm239, %v305, %v291
        %v316 = vsel %vm240, %v290, %v304
        %v317 = vsel %vm241, %v291, %v305
        %v318 = vsel %vm242, %v314, %v306
        %v319 = vsel %vm243, %v315, %v307
        %v320 = vsel %vm242, %v297, %v263
        %v321 = vsel %vm243, %v298, %v262
        %v322 = vsel %vm242, %v316, %v308
        %v323 = vsel %vm243, %v317, %v309
        %v324 = vsel %vm244, %v306, %v314
        %v325 = vsel %vm245, %v307, %v315
        %v326 = vsel %vm244, %v263, %v297
        %v327 = vsel %vm245, %v262, %v298
        %v328 = vsel %vm244, %v308, %v316
        %v329 = vsel %vm245, %v309, %v317
        %v332 = vrot.slane %v320, 4
        %v333 = vrot.slane %v321, 4
        %v338 = vrot.slane %v310, 4
        %v339 = vrot.slane %v311, 4
        %v344 = vrot.slane %v312, 4
        %v345 = vrot.slane %v313, 4
        %v350 = vrot.slane %v326, 4
        %v351 = vrot.slane %v327, 4
        %vm354 = vcmask 1043456
        %v355 = vsel %vm354, %v318, %v332
        %v356 = vsel %vm354, %v319, %v333
        %v357 = vsel %vm354, %v322, %v338
        %v358 = vsel %vm354, %v323, %v339
        %v359 = vsel %vm354, %v186, %v344
        %v360 = vsel %vm354, %v248, %v345
        %v361 = vsel %vm354, %v324, %v350
        %v362 = vsel %vm354, %v325, %v351
        %vm363 = vcmask 293888
        %v365 = vsel %vm363, %v246, 0
        %v368 = vsel %vm354, %v328, 0
        %v371 = vsel %vm354, %v329, 0
        %373 = vmatprep.subr.mxu0 %v356
        %374 = vmatpush1.msra.mxu0 %v355
        %375 = vmatprep.subr.mxu0 %v358
        %376 = vmatpush1.msra.mxu0 %v357
        %377 = vmatprep.subr.mxu0 %v360
        %378 = vmatpush1.msra.mxu0 %v359
        %379 = vmatprep.subr.mxu0 %v362
        %380 = vmatpush1.msra.mxu0 %v361
        %381 = vmatprep.subr.mxu0 %v371
        %382 = vmatpush1.msra.mxu0 %v368
        %383 = vmatprep.subr.mxu0 0.0
        %384 = vmatpush1.msra.mxu0 0.0
        %385 = vmatprep.subr.mxu0 0.0
        %386 = vmatpush1.msra.mxu0 0.0
        %387 = vmatprep.subr.mxu0 0.0
        %388 = vmatpush1.msra.mxu0 0.0
        %389 = vmatprep.subr.mxu0 0.0
        %390 = vmatpush1.msra.mxu0 0.0
        %391 = vmatprep.subr.mxu0 0.0
        %392 = vmatpush1.msra.mxu0 0.0
        %393 = vmatprep.subr.mxu0 0.0
        %394 = vmatpush1.msra.mxu0 0.0
        %395 = vmatprep.subr.mxu0 0.0
        %396 = vmatpush1.msra.mxu0 0.0
        %397 = vmatprep.subr.mxu0 0.0
        %398 = vmatpush1.msra.mxu0 0.0
        %399 = vmatprep.subr.mxu0 0.0
        %400 = vmatpush1.msra.mxu0 0.0
        %401 = vmatprep.subr.mxu0 0.0
        %402 = vmatpush1.msra.mxu0 0.0
        %403 = vmatprep.subr.mxu0 0.0
        %404 = vmatpush1.msra.mxu0 0.0
        %405 = vmatprep.subr.mxu0 0.0
        %406 = vmatpush1.msra.mxu0 0.0
        %407 = vmatprep.subr.mxu0 0.0
        %408 = vmatpush1.msra.mxu0 0.0
        %409 = vmatprep.subr.mxu0 0.0
        %410 = vmatpush1.msra.mxu0 0.0
        %411 = vmatprep.subr.mxu0 0.0
        %412 = vmatpush1.msra.mxu0 0.0
        %413 = vmatprep.subr.mxu0 0.0
        %414 = vmatpush1.msra.mxu0 0.0
        %415 = vmatprep.subr.mxu0 0.0
        %416 = vmatpush1.msra.mxu0 0.0
        %417 = vmatprep.subr.mxu0 0.0
        %418 = vmatpush1.msra.mxu0 0.0
        %419 = vmatprep.subr.mxu0 0.0
        %420 = vmatpush1.msra.mxu0 0.0
        %421 = vmatprep.subr.mxu0 0.0
        %422 = vmatpush1.msra.mxu0 0.0
        %423 = vmatprep.subr.mxu0 0.0
        %424 = vmatpush1.msra.mxu0 0.0
        %425 = vmatprep.subr.mxu0 0.0
        %426 = vmatpush1.msra.mxu0 0.0
        %427 = vmatprep.subr.mxu0 0.0
        %428 = vmatpush1.msra.mxu0 0.0
        %429 = vmatprep.subr.mxu0 0.0
        %430 = vmatpush1.msra.mxu0 0.0
        %431 = vmatprep.subr.mxu0 0.0
        %432 = vmatpush1.msra.mxu0 0.0
        %433 = vmatprep.subr.mxu0 0.0
        %434 = vmatpush1.msra.mxu0 0.0
        %435 = vmatprep.subr.mxu0 0.0
        %436 = vmatpush1.msra.mxu0 0.0
        %437 = vmatprep.mubr.f32.mxu0 0.0
        %438 = vmatmul.mubr.f32.gmra.mrb[0].mxu0 %v365
        %v439 = vpop.f32.mrb[0].mxu0
        %v440 = vadd.f32 0.0, %v439
        %v441 = vpop.f32.mrb[0].mxu0
        %v442 = vadd.f32 0.0, %v441
        %443 = vdwg.mxu0
        %v444 = vsel %vm354, %v440, 0.0
        %v445 = vsel %vm354, %v442, 0.0
        %v446 = vadd.f32 %v444, %v445
        %447 = vadd.xlane.f32.xlu0 %v446
        %v448 = vpop.xlane.xlu0 %447
        %v449 = vmul.f32 %v448, 0.00390625
        %v450 = vmul.f32 %v440, %v440
        %v451 = vmul.f32 %v442, %v442
        %v452 = vsel %vm354, %v450, 0.0
        %v453 = vsel %vm354, %v451, 0.0
        %v454 = vadd.f32 %v452, %v453
        %455 = vadd.xlane.f32.xlu0 %v454
        %v456 = vpop.xlane.xlu0 %455
        %v457 = vmul.f32 %v456, 0.00390625
        %v458 = vmul.f32 %v449, %v449
        %v459 = vsub.f32 %v457, %v458
        %v460 = vsub.f32 %v440, %v449
        %v461 = vsub.f32 %v442, %v449
        %v462 = vadd.f32 %v459, 1e-05
        %v463 = vrsqrt.pop %v462
        %v464 = vmul.f32 %v460, %v463
        %v465 = vmul.f32 %v461, %v463
        %v466 = vld [vmem:[%s2 + $0x18] sm:$0xff]
        %v467 = vld [vmem:[%s2 + $0x20] sm:$0xf]
        %v468 = vld [vmem:[%s2 + $0x28] sm:$0xff]
        %v469 = vld [vmem:[%s2 + $0x30] sm:$0xf]
        %v470 = vld [vmem:[%s184] sm:$0x1]
        %v472 = vlaneseq
        %v473 = vshrl.u32 %v472, 7
        %v474 = vsub.s32 0, %v473
        %v475 = vrot.slane %v470, %v474
        %v477 = vmul.f32 %v466, %v475
        %v478 = vmul.f32 %v467, %v475
        %vm479 = vcmask 64512
        %v480 = vsel %vm479, %v477, 0.0
        %481 = vadd.xlane.f32.xlu0 %v480
        %v482 = vpop.xlane.xlu0 %481
        %vm483 = vcmask 60416
        %v484 = vsel %vm483, %v478, 0.0
        %485 = vadd.xlane.f32.xlu0 %v484
        %v486 = vpop.xlane.xlu0 %485
        %v487 = vadd.f32 %v482, %v468
        %v488 = vadd.f32 %v486, %v469
        %v489 = vld [vmem:[%s2 + $0x8] sm:$0xff]
        %v490 = vld [vmem:[%s2 + $0x10] sm:$0xf]
        %v491 = vld [vmem:[%s2 + $0x38] sm:$0xf]
        %v492 = vld [vmem:[%s2 + $0x40] sm:$0xf]
        %494 = vset.pattern.permute.xlu0 0
        %495 = vperm.xlu0 %494, %v487
        %v496 = vpop.permute.xlu0 %495
        %499 = vset.pattern.permute.xlu0 0
        %500 = vperm.xlu0 %499, %v488
        %v501 = vpop.permute.xlu0 %500
        %vm503 = vcmask 31744
        %v505 = vsel %vm503, %v489, 0
        %v508 = vsel %vm503, %v490, 0
        %v511 = vsel %vm354, %v464, 0
        %v514 = vsel %vm354, %v465, 0
        %516 = vmatprep.subr.mxu0 %v514
        %517 = vmatpush1.msra.mxu0 %v511
        %518 = vmatprep.subr.mxu0 0.0
        %519 = vmatpush1.msra.mxu0 0.0
        %520 = vmatprep.subr.mxu0 0.0
        %521 = vmatpush1.msra.mxu0 0.0
        %522 = vmatprep.subr.mxu0 0.0
        %523 = vmatpush1.msra.mxu0 0.0
        %524 = vmatprep.subr.mxu0 0.0
        %525 = vmatpush1.msra.mxu0 0.0
        %526 = vmatprep.subr.mxu0 0.0
        %527 = vmatpush1.msra.mxu0 0.0
        %528 = vmatprep.subr.mxu0 0.0
        %529 = vmatpush1.msra.mxu0 0.0
        %530 = vmatprep.subr.mxu0 0.0
        %531 = vmatpush1.msra.mxu0 0.0
        %532 = vmatprep.subr.mxu0 0.0
        %533 = vmatpush1.msra.mxu0 0.0
        %534 = vmatprep.subr.mxu0 0.0
        %535 = vmatpush1.msra.mxu0 0.0
        %536 = vmatprep.subr.mxu0 0.0
        %537 = vmatpush1.msra.mxu0 0.0
        %538 = vmatprep.subr.mxu0 0.0
        %539 = vmatpush1.msra.mxu0 0.0
        %540 = vmatprep.subr.mxu0 0.0
        %541 = vmatpush1.msra.mxu0 0.0
        %542 = vmatprep.subr.mxu0 0.0
        %543 = vmatpush1.msra.mxu0 0.0
        %544 = vmatprep.subr.mxu0 0.0
        %545 = vmatpush1.msra.mxu0 0.0
        %546 = vmatprep.subr.mxu0 0.0
        %547 = vmatpush1.msra.mxu0 0.0
        %548 = vmatprep.subr.mxu0 0.0
        %549 = vmatpush1.msra.mxu0 0.0
        %550 = vmatprep.subr.mxu0 0.0
        %551 = vmatpush1.msra.mxu0 0.0
        %552 = vmatprep.subr.mxu0 0.0
        %553 = vmatpush1.msra.mxu0 0.0
        %554 = vmatprep.subr.mxu0 0.0
        %555 = vmatpush1.msra.mxu0 0.0
        %556 = vmatprep.subr.mxu0 0.0
        %557 = vmatpush1.msra.mxu0 0.0
        %558 = vmatprep.subr.mxu0 0.0
        %559 = vmatpush1.msra.mxu0 0.0
        %560 = vmatprep.subr.mxu0 0.0
        %561 = vmatpush1.msra.mxu0 0.0
        %562 = vmatprep.subr.mxu0 0.0
        %563 = vmatpush1.msra.mxu0 0.0
        %564 = vmatprep.subr.mxu0 0.0
        %565 = vmatpush1.msra.mxu0 0.0
        %566 = vmatprep.subr.mxu0 0.0
        %567 = vmatpush1.msra.mxu0 0.0
        %568 = vmatprep.subr.mxu0 0.0
        %569 = vmatpush1.msra.mxu0 0.0
        %570 = vmatprep.subr.mxu0 0.0
        %571 = vmatpush1.msra.mxu0 0.0
        %572 = vmatprep.subr.mxu0 0.0
        %573 = vmatpush1.msra.mxu0 0.0
        %574 = vmatprep.subr.mxu0 0.0
        %575 = vmatpush1.msra.mxu0 0.0
        %576 = vmatprep.subr.mxu0 0.0
        %577 = vmatpush1.msra.mxu0 0.0
        %578 = vmatprep.subr.mxu0 0.0
        %579 = vmatpush1.msra.mxu0 0.0
        %580 = vmatprep.mubr.f32.mxu0 0.0
        %581 = vmatmul.mubr.f32.gmra.mrb[0].mxu0 %v505
        %v582 = vpop.f32.mrb[0].mxu0
        %v583 = vadd.f32 %v496, %v582
        %v584 = vpop.f32.mrb[0].mxu0
        %v585 = vadd.f32 %v496, %v584
        %586 = vmatprep.mubr.f32.mxu0 0.0
        %587 = vmatmul.mubr.f32.gmra.mrb[0].mxu0 %v508
        %v588 = vpop.f32.mrb[0].mxu0
        %v589 = vadd.f32 %v501, %v588
        %v590 = vpop.f32.mrb[0].mxu0
        %v591 = vadd.f32 %v501, %v590
        %592 = vdwg.mxu0
        %v593 = vmax.f32 %v583, 0.0
        %v594 = vmax.f32 %v585, 0.0
        %v595 = vmax.f32 %v589, 0.0
        %v596 = vmax.f32 %v591, 0.0
        %598 = vset.pattern.permute.xlu0 0
        %599 = vperm.xlu0 %598, %v492
        %v600 = vpop.permute.xlu0 %599
        %vm602 = vcmask 97280
        %v604 = vsel %vm602, %v491, 0
        %v607 = vsel %vm354, %v595, 0
        %v610 = vsel %vm354, %v596, 0
        %612 = vmatprep.subr.mxu0 %v594
        %613 = vmatpush1.msra.mxu0 %v593
        %614 = vmatprep.subr.mxu0 %v610
        %615 = vmatpush1.msra.mxu0 %v607
        %616 = vmatprep.subr.mxu0 0.0
        %617 = vmatpush1.msra.mxu0 0.0
        %618 = vmatprep.subr.mxu0 0.0
        %619 = vmatpush1.msra.mxu0 0.0
        %620 = vmatprep.subr.mxu0 0.0
        %621 = vmatpush1.msra.mxu0 0.0
        %622 = vmatprep.subr.mxu0 0.0
        %623 = vmatpush1.msra.mxu0 0.0
        %624 = vmatprep.subr.mxu0 0.0
        %625 = vmatpush1.msra.mxu0 0.0
        %626 = vmatprep.subr.mxu0 0.0
        %627 = vmatpush1.msra.mxu0 0.0
        %628 = vmatprep.subr.mxu0 0.0
        %629 = vmatpush1.msra.mxu0 0.0
        %630 = vmatprep.subr.mxu0 0.0
        %631 = vmatpush1.msra.mxu0 0.0
        %632 = vmatprep.subr.mxu0 0.0
        %633 = vmatpush1.msra.mxu0 0.0
        %634 = vmatprep.subr.mxu0 0.0
        %635 = vmatpush1.msra.mxu0 0.0
        %636 = vmatprep.subr.mxu0 0.0
        %637 = vmatpush1.msra.mxu0 0.0
        %638 = vmatprep.subr.mxu0 0.0
        %639 = vmatpush1.msra.mxu0 0.0
        %640 = vmatprep.subr.mxu0 0.0
        %641 = vmatpush1.msra.mxu0 0.0
        %642 = vmatprep.subr.mxu0 0.0
        %643 = vmatpush1.msra.mxu0 0.0
        %644 = vmatprep.subr.mxu0 0.0
        %645 = vmatpush1.msra.mxu0 0.0
        %646 = vmatprep.subr.mxu0 0.0
        %647 = vmatpush1.msra.mxu0 0.0
        %648 = vmatprep.subr.mxu0 0.0
        %649 = vmatpush1.msra.mxu0 0.0
        %650 = vmatprep.subr.mxu0 0.0
        %651 = vmatpush1.msra.mxu0 0.0
        %652 = vmatprep.subr.mxu0 0.0
        %653 = vmatpush1.msra.mxu0 0.0
        %654 = vmatprep.subr.mxu0 0.0
        %655 = vmatpush1.msra.mxu0 0.0
        %656 = vmatprep.subr.mxu0 0.0
        %657 = vmatpush1.msra.mxu0 0.0
        %658 = vmatprep.subr.mxu0 0.0
        %659 = vmatpush1.msra.mxu0 0.0
        %660 = vmatprep.subr.mxu0 0.0
        %661 = vmatpush1.msra.mxu0 0.0
        %662 = vmatprep.subr.mxu0 0.0
        %663 = vmatpush1.msra.mxu0 0.0
        %664 = vmatprep.subr.mxu0 0.0
        %665 = vmatpush1.msra.mxu0 0.0
        %666 = vmatprep.subr.mxu0 0.0
        %667 = vmatpush1.msra.mxu0 0.0
        %668 = vmatprep.subr.mxu0 0.0
        %669 = vmatpush1.msra.mxu0 0.0
        %670 = vmatprep.subr.mxu0 0.0
        %671 = vmatpush1.msra.mxu0 0.0
        %672 = vmatprep.subr.mxu0 0.0
        %673 = vmatpush1.msra.mxu0 0.0
        %674 = vmatprep.subr.mxu0 0.0
        %675 = vmatpush1.msra.mxu0 0.0
        %676 = vmatprep.mubr.f32.mxu0 0.0
        %677 = vmatmul.mubr.f32.gmra.mrb[0].mxu0 %v604
        %v678 = vpop.f32.mrb[0].mxu0
        %v679 = vadd.f32 %v600, %v678
        %v680 = vpop.f32.mrb[0].mxu0
        %v681 = vadd.f32 %v600, %v680
        %682 = vdwg.mxu0
        %v683 = vmax.f32 %v679, 0.0
        %v684 = vmax.f32 %v681, 0.0
        %v685 = vld [vmem:[%s2 + $0x48] sm:$0xf]
        %686 = vrot.lane.b32.xlu0 %v683, 17
        %v687 = vpop.permute.xlu0 %686
        %688 = vrot.lane.b32.xlu0 %v684, 17
        %v689 = vpop.permute.xlu0 %688
        %v690 = vsel %vm254, %v687, %v689
        %v691 = vsel %vm254, %v689, %v687
        %692 = vrot.lane.b32.xlu0 %v683, 16
        %v693 = vpop.permute.xlu0 %692
        %694 = vrot.lane.b32.xlu0 %v684, 16
        %v695 = vpop.permute.xlu0 %694
        %v696 = vsel %vm261, %v693, %v695
        %v697 = vsel %vm261, %v695, %v693
        %698 = vrot.lane.b32.xlu0 %v683, 15
        %v699 = vpop.permute.xlu0 %698
        %700 = vrot.lane.b32.xlu0 %v684, 15
        %v701 = vpop.permute.xlu0 %700
        %v702 = vsel %vm268, %v699, %v701
        %v703 = vsel %vm268, %v701, %v699
        %704 = vrot.lane.b32.xlu0 %v683, 1
        %v705 = vpop.permute.xlu0 %704
        %706 = vrot.lane.b32.xlu0 %v684, 1
        %v707 = vpop.permute.xlu0 %706
        %v708 = vsel %vm275, %v705, %v707
        %v709 = vsel %vm275, %v707, %v705
        %710 = vrot.lane.b32.xlu0 %v683, 127
        %v711 = vpop.permute.xlu0 %710
        %712 = vrot.lane.b32.xlu0 %v684, 127
        %v713 = vpop.permute.xlu0 %712
        %v714 = vsel %vm282, %v711, %v713
        %v715 = vsel %vm282, %v713, %v711
        %716 = vrot.lane.b32.xlu0 %v683, 113
        %v717 = vpop.permute.xlu0 %716
        %718 = vrot.lane.b32.xlu0 %v684, 113
        %v719 = vpop.permute.xlu0 %718
        %v720 = vsel %vm289, %v717, %v719
        %v721 = vsel %vm289, %v719, %v717
        %722 = vrot.lane.b32.xlu0 %v683, 112
        %v723 = vpop.permute.xlu0 %722
        %724 = vrot.lane.b32.xlu0 %v684, 112
        %v725 = vpop.permute.xlu0 %724
        %v726 = vsel %vm296, %v723, %v725
        %v727 = vsel %vm296, %v725, %v723
        %728 = vrot.lane.b32.xlu0 %v683, 111
        %v729 = vpop.permute.xlu0 %728
        %730 = vrot.lane.b32.xlu0 %v684, 111
        %v731 = vpop.permute.xlu0 %730
        %v732 = vsel %vm303, %v729, %v731
        %v733 = vsel %vm303, %v731, %v729
        %v734 = vsel %vm238, %v703, %v691
        %v735 = vsel %vm239, %v702, %v690
        %v736 = vsel %vm240, %v691, %v703
        %v737 = vsel %vm241, %v690, %v702
        %v738 = vsel %vm238, %v714, %v709
        %v739 = vsel %vm239, %v715, %v708
        %v740 = vsel %vm240, %v709, %v714
        %v741 = vsel %vm241, %v708, %v715
        %v742 = vsel %vm238, %v732, %v720
        %v743 = vsel %vm239, %v733, %v721
        %v744 = vsel %vm240, %v720, %v732
        %v745 = vsel %vm241, %v721, %v733
        %v746 = vsel %vm242, %v742, %v734
        %v747 = vsel %vm243, %v743, %v735
        %v748 = vsel %vm242, %v726, %v697
        %v749 = vsel %vm243, %v727, %v696
        %v750 = vsel %vm242, %v744, %v736
        %v751 = vsel %vm243, %v745, %v737
        %v752 = vsel %vm244, %v734, %v742
        %v753 = vsel %vm245, %v735, %v743
        %v754 = vsel %vm244, %v697, %v726
        %v755 = vsel %vm245, %v696, %v727
        %v756 = vsel %vm244, %v736, %v744
        %v757 = vsel %vm245, %v737, %v745
        %v760 = vrot.slane %v748, 4
        %v761 = vrot.slane %v749, 4
        %v766 = vrot.slane %v738, 4
        %v767 = vrot.slane %v739, 4
        %v772 = vrot.slane %v740, 4
        %v773 = vrot.slane %v741, 4
        %v778 = vrot.slane %v754, 4
        %v779 = vrot.slane %v755, 4
        %v782 = vsel %vm354, %v746, %v760
        %v783 = vsel %vm354, %v747, %v761
        %v784 = vsel %vm354, %v750, %v766
        %v785 = vsel %vm354, %v751, %v767
        %v786 = vsel %vm354, %v683, %v772
        %v787 = vsel %vm354, %v684, %v773
        %v788 = vsel %vm354, %v752, %v778
        %v789 = vsel %vm354, %v753, %v779
        %v791 = vsel %vm363, %v685, 0
        %v794 = vsel %vm354, %v756, 0
        %v797 = vsel %vm354, %v757, 0
        %799 = vmatprep.subr.mxu0 %v783
        %800 = vmatpush1.msra.mxu0 %v782
        %801 = vmatprep.subr.mxu0 %v785
        %802 = vmatpush1.msra.mxu0 %v784
        %803 = vmatprep.subr.mxu0 %v787
        %804 = vmatpush1.msra.mxu0 %v786
        %805 = vmatprep.subr.mxu0 %v789
        %806 = vmatpush1.msra.mxu0 %v788
        %807 = vmatprep.subr.mxu0 %v797
        %808 = vmatpush1.msra.mxu0 %v794
        %809 = vmatprep.subr.mxu0 0.0
        %810 = vmatpush1.msra.mxu0 0.0
        %811 = vmatprep.subr.mxu0 0.0
        %812 = vmatpush1.msra.mxu0 0.0
        %813 = vmatprep.subr.mxu0 0.0
        %814 = vmatpush1.msra.mxu0 0.0
        %815 = vmatprep.subr.mxu0 0.0
        %816 = vmatpush1.msra.mxu0 0.0
        %817 = vmatprep.subr.mxu0 0.0
        %818 = vmatpush1.msra.mxu0 0.0
        %819 = vmatprep.subr.mxu0 0.0
        %820 = vmatpush1.msra.mxu0 0.0
        %821 = vmatprep.subr.mxu0 0.0
        %822 = vmatpush1.msra.mxu0 0.0
        %823 = vmatprep.subr.mxu0 0.0
        %824 = vmatpush1.msra.mxu0 0.0
        %825 = vmatprep.subr.mxu0 0.0
        %826 = vmatpush1.msra.mxu0 0.0
        %827 = vmatprep.subr.mxu0 0.0
        %828 = vmatpush1.msra.mxu0 0.0
        %829 = vmatprep.subr.mxu0 0.0
        %830 = vmatpush1.msra.mxu0 0.0
        %831 = vmatprep.subr.mxu0 0.0
        %832 = vmatpush1.msra.mxu0 0.0
        %833 = vmatprep.subr.mxu0 0.0
        %834 = vmatpush1.msra.mxu0 0.0
        %835 = vmatprep.subr.mxu0 0.0
        %836 = vmatpush1.msra.mxu0 0.0
        %837 = vmatprep.subr.mxu0 0.0
        %838 = vmatpush1.msra.mxu0 0.0
        %839 = vmatprep.subr.mxu0 0.0
        %840 = vmatpush1.msra.mxu0 0.0
        %841 = vmatprep.subr.mxu0 0.0
        %842 = vmatpush1.msra.mxu0 0.0
        %843 = vmatprep.subr.mxu0 0.0
        %844 = vmatpush1.msra.mxu0 0.0
        %845 = vmatprep.subr.mxu0 0.0
        %846 = vmatpush1.msra.mxu0 0.0
        %847 = vmatprep.subr.mxu0 0.0
        %848 = vmatpush1.msra.mxu0 0.0
        %849 = vmatprep.subr.mxu0 0.0
        %850 = vmatpush1.msra.mxu0 0.0
        %851 = vmatprep.subr.mxu0 0.0
        %852 = vmatpush1.msra.mxu0 0.0
        %853 = vmatprep.subr.mxu0 0.0
        %854 = vmatpush1.msra.mxu0 0.0
        %855 = vmatprep.subr.mxu0 0.0
        %856 = vmatpush1.msra.mxu0 0.0
        %857 = vmatprep.subr.mxu0 0.0
        %858 = vmatpush1.msra.mxu0 0.0
        %859 = vmatprep.subr.mxu0 0.0
        %860 = vmatpush1.msra.mxu0 0.0
        %861 = vmatprep.subr.mxu0 0.0
        %862 = vmatpush1.msra.mxu0 0.0
        %863 = vmatprep.mubr.f32.mxu0 0.0
        %864 = vmatmul.mubr.f32.gmra.mrb[0].mxu0 %v791
        %v865 = vpop.f32.mrb[0].mxu0
        %v866 = vadd.f32 0.0, %v865
        %v867 = vpop.f32.mrb[0].mxu0
        %v868 = vadd.f32 0.0, %v867
        %869 = vdwg.mxu0
        %v870 = vsel %vm354, %v866, 0.0
        %v871 = vsel %vm354, %v868, 0.0
        %v872 = vadd.f32 %v870, %v871
        %873 = vadd.xlane.f32.xlu0 %v872
        %v874 = vpop.xlane.xlu0 %873
        %v875 = vmul.f32 %v874, 0.00390625
        %v876 = vmul.f32 %v866, %v866
        %v877 = vmul.f32 %v868, %v868
        %v878 = vsel %vm354, %v876, 0.0
        %v879 = vsel %vm354, %v877, 0.0
        %v880 = vadd.f32 %v878, %v879
        %881 = vadd.xlane.f32.xlu0 %v880
        %v882 = vpop.xlane.xlu0 %881
        %v883 = vmul.f32 %v882, 0.00390625
        %v884 = vmul.f32 %v875, %v875
        %v885 = vsub.f32 %v883, %v884
        %v886 = vsub.f32 %v866, %v875
        %v887 = vsub.f32 %v868, %v875
        %v888 = vadd.f32 %v885, 1e-05
        %v889 = vrsqrt.pop %v888
        %v890 = vmul.f32 %v886, %v889
        %v891 = vmul.f32 %v887, %v889
        %v892 = vld [vmem:[%s2 + $0x60] sm:$0xff]
        %v893 = vld [vmem:[%s2 + $0x68] sm:$0xf]
        %v894 = vld [vmem:[%s2 + $0x70] sm:$0xff]
        %v895 = vld [vmem:[%s2 + $0x78] sm:$0xf]
        %v896 = vmul.f32 %v892, %v475
        %v897 = vmul.f32 %v893, %v475
        %v898 = vsel %vm479, %v896, 0.0
        %899 = vadd.xlane.f32.xlu0 %v898
        %v900 = vpop.xlane.xlu0 %899
        %v901 = vsel %vm483, %v897, 0.0
        %902 = vadd.xlane.f32.xlu0 %v901
        %v903 = vpop.xlane.xlu0 %902
        %v904 = vadd.f32 %v900, %v894
        %v905 = vadd.f32 %v903, %v895
        %v906 = vld [vmem:[%s2 + $0x50] sm:$0xff]
        %v907 = vld [vmem:[%s2 + $0x58] sm:$0xf]
        %v908 = vld [vmem:[%s2 + $0x80] sm:$0xf]
        %v909 = vld [vmem:[%s2 + $0x88] sm:$0xf]
        %911 = vset.pattern.permute.xlu0 0
        %912 = vperm.xlu0 %911, %v904
        %v913 = vpop.permute.xlu0 %912
        %916 = vset.pattern.permute.xlu0 0
        %917 = vperm.xlu0 %916, %v905
        %v918 = vpop.permute.xlu0 %917
        %v921 = vsel %vm503, %v906, 0
        %v924 = vsel %vm503, %v907, 0
        %v927 = vsel %vm354, %v890, 0
        %v930 = vsel %vm354, %v891, 0
        %932 = vmatprep.subr.mxu0 %v930
        %933 = vmatpush1.msra.mxu0 %v927
        %934 = vmatprep.subr.mxu0 0.0
        %935 = vmatpush1.msra.mxu0 0.0
        %936 = vmatprep.subr.mxu0 0.0
        %937 = vmatpush1.msra.mxu0 0.0
        %938 = vmatprep.subr.mxu0 0.0
        %939 = vmatpush1.msra.mxu0 0.0
        %940 = vmatprep.subr.mxu0 0.0
        %941 = vmatpush1.msra.mxu0 0.0
        %942 = vmatprep.subr.mxu0 0.0
        %943 = vmatpush1.msra.mxu0 0.0
        %944 = vmatprep.subr.mxu0 0.0
        %945 = vmatpush1.msra.mxu0 0.0
        %946 = vmatprep.subr.mxu0 0.0
        %947 = vmatpush1.msra.mxu0 0.0
        %948 = vmatprep.subr.mxu0 0.0
        %949 = vmatpush1.msra.mxu0 0.0
        %950 = vmatprep.subr.mxu0 0.0
        %951 = vmatpush1.msra.mxu0 0.0
        %952 = vmatprep.subr.mxu0 0.0
        %953 = vmatpush1.msra.mxu0 0.0
        %954 = vmatprep.subr.mxu0 0.0
        %955 = vmatpush1.msra.mxu0 0.0
        %956 = vmatprep.subr.mxu0 0.0
        %957 = vmatpush1.msra.mxu0 0.0
        %958 = vmatprep.subr.mxu0 0.0
        %959 = vmatpush1.msra.mxu0 0.0
        %960 = vmatprep.subr.mxu0 0.0
        %961 = vmatpush1.msra.mxu0 0.0
        %962 = vmatprep.subr.mxu0 0.0
        %963 = vmatpush1.msra.mxu0 0.0
        %964 = vmatprep.subr.mxu0 0.0
        %965 = vmatpush1.msra.mxu0 0.0
        %966 = vmatprep.subr.mxu0 0.0
        %967 = vmatpush1.msra.mxu0 0.0
        %968 = vmatprep.subr.mxu0 0.0
        %969 = vmatpush1.msra.mxu0 0.0
        %970 = vmatprep.subr.mxu0 0.0
        %971 = vmatpush1.msra.mxu0 0.0
        %972 = vmatprep.subr.mxu0 0.0
        %973 = vmatpush1.msra.mxu0 0.0
        %974 = vmatprep.subr.mxu0 0.0
        %975 = vmatpush1.msra.mxu0 0.0
        %976 = vmatprep.subr.mxu0 0.0
        %977 = vmatpush1.msra.mxu0 0.0
        %978 = vmatprep.subr.mxu0 0.0
        %979 = vmatpush1.msra.mxu0 0.0
        %980 = vmatprep.subr.mxu0 0.0
        %981 = vmatpush1.msra.mxu0 0.0
        %982 = vmatprep.subr.mxu0 0.0
        %983 = vmatpush1.msra.mxu0 0.0
        %984 = vmatprep.subr.mxu0 0.0
        %985 = vmatpush1.msra.mxu0 0.0
        %986 = vmatprep.subr.mxu0 0.0
        %987 = vmatpush1.msra.mxu0 0.0
        %988 = vmatprep.subr.mxu0 0.0
        %989 = vmatpush1.msra.mxu0 0.0
        %990 = vmatprep.subr.mxu0 0.0
        %991 = vmatpush1.msra.mxu0 0.0
        %992 = vmatprep.subr.mxu0 0.0
        %993 = vmatpush1.msra.mxu0 0.0
        %994 = vmatprep.subr.mxu0 0.0
        %995 = vmatpush1.msra.mxu0 0.0
        %996 = vmatprep.mubr.f32.mxu0 0.0
        %997 = vmatmul.mubr.f32.gmra.mrb[0].mxu0 %v921
        %v998 = vpop.f32.mrb[0].mxu0
        %v999 = vadd.f32 %v913, %v998
        %v1000 = vpop.f32.mrb[0].mxu0
        %v1001 = vadd.f32 %v913, %v1000
        %1002 = vmatprep.mubr.f32.mxu0 0.0
        %1003 = vmatmul.mubr.f32.gmra.mrb[0].mxu0 %v924
        %v1004 = vpop.f32.mrb[0].mxu0
        %v1005 = vadd.f32 %v918, %v1004
        %v1006 = vpop.f32.mrb[0].mxu0
        %v1007 = vadd.f32 %v918, %v1006
        %1008 = vdwg.mxu0
        %v1009 = vmax.f32 %v999, 0.0
        %v1010 = vmax.f32 %v1001, 0.0
        %v1011 = vmax.f32 %v1005, 0.0
        %v1012 = vmax.f32 %v1007, 0.0
        %1014 = vset.pattern.permute.xlu0 0
        %1015 = vperm.xlu0 %1014, %v909
        %v1016 = vpop.permute.xlu0 %1015
        %v1019 = vsel %vm602, %v908, 0
        %v1022 = vsel %vm354, %v1011, 0
        %v1025 = vsel %vm354, %v1012, 0
        %1027 = vmatprep.subr.mxu0 %v1010
        %1028 = vmatpush1.msra.mxu0 %v1009
        %1029 = vmatprep.subr.mxu0 %v1025
        %1030 = vmatpush1.msra.mxu0 %v1022
        %1031 = vmatprep.subr.mxu0 0.0
        %1032 = vmatpush1.msra.mxu0 0.0
        %1033 = vmatprep.subr.mxu0 0.0
        %1034 = vmatpush1.msra.mxu0 0.0
        %1035 = vmatprep.subr.mxu0 0.0
        %1036 = vmatpush1.msra.mxu0 0.0
        %1037 = vmatprep.subr.mxu0 0.0
        %1038 = vmatpush1.msra.mxu0 0.0
        %1039 = vmatprep.subr.mxu0 0.0
        %1040 = vmatpush1.msra.mxu0 0.0
        %1041 = vmatprep.subr.mxu0 0.0
        %1042 = vmatpush1.msra.mxu0 0.0
        %1043 = vmatprep.subr.mxu0 0.0
        %1044 = vmatpush1.msra.mxu0 0.0
        %1045 = vmatprep.subr.mxu0 0.0
        %1046 = vmatpush1.msra.mxu0 0.0
        %1047 = vmatprep.subr.mxu0 0.0
        %1048 = vmatpush1.msra.mxu0 0.0
        %1049 = vmatprep.subr.mxu0 0.0
        %1050 = vmatpush1.msra.mxu0 0.0
        %1051 = vmatprep.subr.mxu0 0.0
        %1052 = vmatpush1.msra.mxu0 0.0
        %1053 = vmatprep.subr.mxu0 0.0
        %1054 = vmatpush1.msra.mxu0 0.0
        %1055 = vmatprep.subr.mxu0 0.0
        %1056 = vmatpush1.msra.mxu0 0.0
        %1057 = vmatprep.subr.mxu0 0.0
        %1058 = vmatpush1.msra.mxu0 0.0
        %1059 = vmatprep.subr.mxu0 0.0
        %1060 = vmatpush1.msra.mxu0 0.0
        %1061 = vmatprep.subr.mxu0 0.0
        %1062 = vmatpush1.msra.mxu0 0.0
        %1063 = vmatprep.subr.mxu0 0.0
        %1064 = vmatpush1.msra.mxu0 0.0
        %1065 = vmatprep.subr.mxu0 0.0
        %1066 = vmatpush1.msra.mxu0 0.0
        %1067 = vmatprep.subr.mxu0 0.0
        %1068 = vmatpush1.msra.mxu0 0.0
        %1069 = vmatprep.subr.mxu0 0.0
        %1070 = vmatpush1.msra.mxu0 0.0
        %1071 = vmatprep.subr.mxu0 0.0
        %1072 = vmatpush1.msra.mxu0 0.0
        %1073 = vmatprep.subr.mxu0 0.0
        %1074 = vmatpush1.msra.mxu0 0.0
        %1075 = vmatprep.subr.mxu0 0.0
        %1076 = vmatpush1.msra.mxu0 0.0
        %1077 = vmatprep.subr.mxu0 0.0
        %1078 = vmatpush1.msra.mxu0 0.0
        %1079 = vmatprep.subr.mxu0 0.0
        %1080 = vmatpush1.msra.mxu0 0.0
        %1081 = vmatprep.subr.mxu0 0.0
        %1082 = vmatpush1.msra.mxu0 0.0
        %1083 = vmatprep.subr.mxu0 0.0
        %1084 = vmatpush1.msra.mxu0 0.0
        %1085 = vmatprep.subr.mxu0 0.0
        %1086 = vmatpush1.msra.mxu0 0.0
        %1087 = vmatprep.subr.mxu0 0.0
        %1088 = vmatpush1.msra.mxu0 0.0
        %1089 = vmatprep.subr.mxu0 0.0
        %1090 = vmatpush1.msra.mxu0 0.0
        %1091 = vmatprep.mubr.f32.mxu0 0.0
        %1092 = vmatmul.mubr.f32.gmra.mrb[0].mxu0 %v1019
        %v1093 = vpop.f32.mrb[0].mxu0
        %v1094 = vadd.f32 %v1016, %v1093
        %v1095 = vpop.f32.mrb[0].mxu0
        %v1096 = vadd.f32 %v1016, %v1095
        %1097 = vdwg.mxu0
        %v1098 = vmax.f32 %v1094, 0.0
        %v1099 = vmax.f32 %v1096, 0.0
        %v1100 = vadd.f32 %v1098, %v186
        %v1101 = vadd.f32 %v1099, %v248
        %v1104 = vcombine.low %v1100, %v1101
        %1106 = vst [vmem:[%s175] sm:$0xff] %v1104
        %s1107 = sand.u32 %s98, 1
        %s1108 = scalar_lea.sflag [#allocation3], %s1107
        %s1109 = sand.u32 %s98, 1
        %s1110 = smul.addr %s1109, 8
        %s1111 = scalar_lea.vmem [#allocation2], %s1110
        // Predicated region
        $region33: #{tpu_custom_call.1} parent=31 // pred_check
          %p1112 = pneg %p108
        $region34: #{tpu_custom_call.1} parent=31 // pred_check_branch
          %1114 = sbr.rel (%p1112) target = $region36
        $region35: #{tpu_custom_call.1} parent=31 // pred_region
          %s1115 = smul.u32 2, %s17
          %s1117 = ssub.s32 128, 128
          %1118 = vsyncadd %s1108, %s1117
          %s1119 = smul.addr %s1115, 64
          %s1120 = scalar_lea.hbm %s3, %s1119
          %s1122 = sshll.u32 %s1111, 4
          %s1123 = int_to_ptr.vmem [resolvable:$true] %s1122
          %1125 = dma.vmem_to_hbm [thread:$0]  %s1123, 128, %s1120, %s1108
        $region36: #{tpu_custom_call.1} parent=31 // pred_fallthru
          _
      $region32: #{tpu_custom_call.1} parent=5 // pred_fallthru
        _
      %p1126 = scmp.le.s32.totalorder 2, %s12
      // Predicated region
      $region37: #{tpu_custom_call.1} parent=5 // pred_check
        %p1127 = pneg %p1126
      $region38: #{tpu_custom_call.1} parent=5 // pred_check_branch
        %1129 = sbr.rel (%p1127) target = $region40
      $region39: #{tpu_custom_call.1} parent=5 // pred_region
        %s1130 = ssub.s32 %s12, 2
        // Predicated region
        $region41: #{tpu_custom_call.1} parent=39 // pred_check
          %p1131 = pneg %p114
        $region42: #{tpu_custom_call.1} parent=39 // pred_check_branch
          %1133 = sbr.rel (%p1131) target = $region44
        $region43: #{tpu_custom_call.1} parent=39 // pred_region
          %s1134 = sand.u32 %s99, 1
          %s1135 = scalar_lea.sflag [#allocation3], %s1134
          %s1136 = sand.u32 %s99, 1
          %s1137 = smul.addr %s1136, 8
          %s1138 = scalar_lea.vmem [#allocation2], %s1137
          %1139 = dma.done %s1135, 128
        $region44: #{tpu_custom_call.1} parent=39 // pred_fallthru
          _
      $region40: #{tpu_custom_call.1} parent=5 // pred_fallthru
        _
    $region6: #{tpu_custom_call.1} parent=1 // loop_footer
      %s16 = sadd.s32 1, %s12
    $region7: #{tpu_custom_call.1} parent=1 // loop_footer_branch
      %11 = sbr.rel target = $region3
    $region8: #{tpu_custom_call.1} parent=1 // loop_exit
      _
    %1140 = vsyncpa [#allocation3], 1
    %s1141 = scalar_lea.sflag [#allocation3], 1
    %1142 = vsyncpa %s1141, 1

</llo_original>
